<compile_context>
chip_gen: v5e
topology: v5e:2x2
jax: 0.10.0
libtpu: 0.0.40
codegen_flags: <defaults>
</compile_context>

<pallas_src>
import jax
import jax.numpy as jnp
import numpy as np
from jax.experimental import pallas as pl
from jax.experimental.pallas import tpu as pltpu

# ----- small "config" (GPT-2 block at toy size) -----
B, S, H = 2, 8, 32          # batch, sequence, hidden_size
NUM_HEADS = 4
HEAD_DIM = H // NUM_HEADS
INNER = 4 * H               # n_inner = 4 * hidden_size
LN_EPS = 1e-5
_ATTN_SCALE = 1.0 / (HEAD_DIM ** 0.5)        # scale_attn_weights
_SQRT_2_OVER_PI = 0.7978845608028654
PK_LANES = 128              # packed-parameter lane width (>= 3*H and >= INNER here)


def _gelu_new(x):
    # GPT-2 "gelu_new"; x*x*x instead of jnp.power, constant hoisted.
    return 0.5 * x * (1.0 + jnp.tanh(_SQRT_2_OVER_PI * (x + 0.044715 * x * x * x)))


def _layernorm(x, g, b):
    mu = jnp.mean(x, axis=-1, keepdims=True)
    var = jnp.mean((x - mu) ** 2, axis=-1, keepdims=True)
    return (x - mu) * jax.lax.rsqrt(var + LN_EPS) * g + b


def gpt2_block_kernel(x_ref, pk_ref, wqkv_ref, waproj_ref, wfc_ref, wmproj_ref,
                      out_ref):
    x = x_ref[...]                       # (B*S, H) fp32
    pk = pk_ref[...]                     # (8, 128) fp32 packed small params
    ln1_g, ln1_b = pk[0:1, :H], pk[1:2, :H]
    ln2_g, ln2_b = pk[2:3, :H], pk[3:4, :H]
    b_qkv = pk[4:5, :3 * H]              # (1, 3H)
    b_aproj = pk[5:6, :H]
    b_mproj = pk[6:7, :H]
    b_fc = pk[7:8, :INNER]               # (1, INNER), INNER == 128 here

    # --- ln_1 (fp32 element-wise) ---
    h = _layernorm(x, ln1_g, ln1_b)

    # --- fused c_attn: one (B*S, H) @ (H, 3H) MXU pass, one bias add ---
    qkv = jnp.dot(h.astype(jnp.bfloat16), wqkv_ref[...],
                  preferred_element_type=jnp.float32) + b_qkv    # (B*S, 3H) fp32

    # Fold batch back out (leading-dim-only reshape: layout no-op).
    qkv3 = qkv.reshape(B, S, 3 * H)      # (B, S, 3H)

    def heads(proj):
        # Gather one projection's heads into a single head-batched operand:
        # (NUM_HEADS*B, S, HEAD_DIM), batch index g = head*B + batch.
        return jnp.concatenate(
            [qkv3[:, :, proj * H + hh * HEAD_DIM: proj * H + (hh + 1) * HEAD_DIM]
             for hh in range(NUM_HEADS)], axis=0)

    qg = heads(0).astype(jnp.bfloat16)
    kg = heads(1).astype(jnp.bfloat16)
    vg = heads(2).astype(jnp.bfloat16)

    # --- head-batched attention (bf16 MXU, fp32 accumulate / softmax) ---
    scores = jnp.einsum('gqd,gkd->gqk', qg, kg,
                        preferred_element_type=jnp.float32) * _ATTN_SCALE
    # use_causal_mask=False (GPT2Block default) -> no causal mask applied.
    scores = scores - jnp.max(scores, axis=-1, keepdims=True)
    e = jnp.exp(scores)                                           # fp32 (EUP)
    probs = e * pl.reciprocal(jnp.sum(e, axis=-1, keepdims=True), approx=True)
    attn = jnp.einsum('gqk,gkd->gqd', probs.astype(jnp.bfloat16), vg,
                      preferred_element_type=jnp.float32)         # (NH*B, S, HD)

    # --- merge heads in vregs: lane concat + leading-dim fold (no scratch) ---
    merged = jnp.concatenate(
        [attn[hh * B:(hh + 1) * B] for hh in range(NUM_HEADS)],
        axis=-1).reshape(B * S, H)                                # (B*S, H) fp32

    # --- c_proj + residual 1 ---
    aout = jnp.dot(merged.astype(jnp.bfloat16), waproj_ref[...],
                   preferred_element_type=jnp.float32) + b_aproj
    h1 = x + aout

    # --- ln_2 + MLP + residual 2 ---
    h2 = _layernorm(h1, ln2_g, ln2_b)
    ff = jnp.dot(h2.astype(jnp.bfloat16), wfc_ref[...],
                 preferred_element_type=jnp.float32) + b_fc
    ff = _gelu_new(ff)                                            # fp32
    ff = jnp.dot(ff.astype(jnp.bfloat16), wmproj_ref[...],
                 preferred_element_type=jnp.float32) + b_mproj
    out_ref[...] = h1 + ff


def gpt2_block(x, params):
    (ln1_g, ln1_b, w_qkv, b_qkv, w_aproj, b_aproj,
     ln2_g, ln2_b, w_fc, b_fc, w_mproj, b_mproj) = params
    bsz, seq, hid = x.shape
    x2d = x.reshape(bsz * seq, hid)                 # flatten B into matmul rows

    # Pack all small per-channel vectors into one (8, 128) fp32 operand.
    def pad_lane(v):
        return jnp.pad(v.astype(jnp.float32), (0, PK_LANES - v.shape[0]))

    pk = jnp.stack([pad_lane(ln1_g), pad_lane(ln1_b),
                    pad_lane(ln2_g), pad_lane(ln2_b),
                    pad_lane(b_qkv), pad_lane(b_aproj),
                    pad_lane(b_mproj), pad_lane(b_fc)], axis=0)   # (8, 128)

    # Advisory cost estimate for XLA scheduling around this tiny custom call.
    m = bsz * seq
    flops = (2 * m * hid * (3 * hid) + 2 * m * hid * hid
             + 2 * m * hid * INNER + 2 * m * INNER * hid
             + 2 * 2 * bsz * NUM_HEADS * seq * seq * HEAD_DIM)
    transcendentals = bsz * NUM_HEADS * seq * seq + m * INNER + 4 * m
    bytes_accessed = (m * hid * 4 + pk.size * 4 + w_qkv.size * 2
                      + w_aproj.size * 2 + w_fc.size * 2 + w_mproj.size * 2
                      + m * hid * 4)

    vmem = pl.BlockSpec(memory_space=pltpu.MemorySpace.VMEM)
    out2d = pl.pallas_call(
        gpt2_block_kernel,
        out_shape=jax.ShapeDtypeStruct((bsz * seq, hid), jnp.float32),
        in_specs=[vmem] * 6,
        out_specs=vmem,
        cost_estimate=pl.CostEstimate(flops=flops,
                                      transcendentals=transcendentals,
                                      bytes_accessed=bytes_accessed),
    )(x2d, pk,
      w_qkv.astype(jnp.bfloat16),
      w_aproj.astype(jnp.bfloat16),
      w_fc.astype(jnp.bfloat16),
      w_mproj.astype(jnp.bfloat16))
    return out2d.reshape(bsz, seq, hid)


# ----- pure-JAX fp32 reference (mirrors the PyTorch forward) -----
def gpt2_block_ref(x, params):
    (ln1_g, ln1_b, w_qkv, b_qkv, w_aproj, b_aproj,
     ln2_g, ln2_b, w_fc, b_fc, w_mproj, b_mproj) = params
    h = _layernorm(x, ln1_g, ln1_b)
    qkv = h @ w_qkv + b_qkv
    q, k, v = jnp.split(qkv, 3, axis=-1)

    def split_heads(t):  # (B,S,H) -> (B,nh,S,dh)
        return t.reshape(B, S, NUM_HEADS, HEAD_DIM).transpose(0, 2, 1, 3)

    qh, kh, vh = split_heads(q), split_heads(k), split_heads(v)
    scores = jnp.einsum('bhqd,bhkd->bhqk', qh, kh) * _ATTN_SCALE
    probs = jax.nn.softmax(scores, axis=-1)
    attn = jnp.einsum('bhqk,bhkd->bhqd', probs, vh)
    attn = attn.transpose(0, 2, 1, 3).reshape(B, S, H)
    attn = attn @ w_aproj + b_aproj
    h1 = x + attn
    h2 = _layernorm(h1, ln2_g, ln2_b)
    ff = _gelu_new(h2 @ w_fc + b_fc) @ w_mproj + b_mproj
    return h1 + ff


if __name__ == "__main__":
    key = jax.random.PRNGKey(0)
    keys = jax.random.split(key, 16)

    x = jax.random.normal(keys[0], (B, S, H), dtype=jnp.float32)

    # Deterministic synthetic parameters (GPT-2 style: N(0, 0.02) weights).
    ln1_g = 1.0 + 0.1 * jax.random.normal(keys[1], (H,), jnp.float32)
    ln1_b = 0.05 * jax.random.normal(keys[2], (H,), jnp.float32)
    w_qkv = 0.02 * jax.random.normal(keys[3], (H, 3 * H), jnp.float32)
    b_qkv = 0.02 * jax.random.normal(keys[4], (3 * H,), jnp.float32)
    w_aproj = 0.02 * jax.random.normal(keys[5], (H, H), jnp.float32)
    b_aproj = 0.02 * jax.random.normal(keys[6], (H,), jnp.float32)
    ln2_g = 1.0 + 0.1 * jax.random.normal(keys[7], (H,), jnp.float32)
    ln2_b = 0.05 * jax.random.normal(keys[8], (H,), jnp.float32)
    w_fc = 0.02 * jax.random.normal(keys[9], (H, INNER), jnp.float32)
    b_fc = 0.02 * jax.random.normal(keys[10], (INNER,), jnp.float32)
    w_mproj = 0.02 * jax.random.normal(keys[11], (INNER, H), jnp.float32)
    b_mproj = 0.02 * jax.random.normal(keys[12], (H,), jnp.float32)

    params = (ln1_g, ln1_b, w_qkv, b_qkv, w_aproj, b_aproj,
              ln2_g, ln2_b, w_fc, b_fc, w_mproj, b_mproj)

    out = gpt2_block(x, params)
    out = jax.block_until_ready(out)

    ref = gpt2_block_ref(x, params)
    # bf16 MXU inputs + approx-reciprocal softmax -> ~1e-3 abs deviation from
    # the fp32 reference at these magnitudes.
    np.testing.assert_allclose(np.asarray(out), np.asarray(ref),
                               rtol=1e-2, atol=1e-2)
    print("KERNEL_OK")
</pallas_src>

<mosaic_0001>
module attributes {stable_mosaic.version = 11 : i64} {
  func.func @gpt2_block_kernel(%arg0: memref<16x32xf32, #tpu.memory_space<vmem>>, %arg1: memref<8x128xf32, #tpu.memory_space<vmem>>, %arg2: memref<32x96xbf16, #tpu.memory_space<vmem>>, %arg3: memref<32x32xbf16, #tpu.memory_space<vmem>>, %arg4: memref<32x128xbf16, #tpu.memory_space<vmem>>, %arg5: memref<128x32xbf16, #tpu.memory_space<vmem>>, %arg6: memref<16x32xf32, #tpu.memory_space<vmem>>) attributes {dimension_semantics = [], scalar_prefetch = 0 : i64, scratch_operands = 0 : i64, tpu.core_type = #tpu.core_type<tc>} {
    %c0 = arith.constant 0 : index
    %c0_0 = arith.constant 0 : index
    %0 = vector.load %arg0[%c0, %c0_0] : memref<16x32xf32, #tpu.memory_space<vmem>>, vector<16x32xf32>
    %c0_1 = arith.constant 0 : index
    %c0_2 = arith.constant 0 : index
    %1 = vector.load %arg1[%c0_1, %c0_2] : memref<8x128xf32, #tpu.memory_space<vmem>>, vector<8x128xf32>
    %2 = vector.extract_strided_slice %1 {offsets = [0, 0], sizes = [1, 32], strides = [1, 1]} : vector<8x128xf32> to vector<1x32xf32>
    %3 = vector.extract_strided_slice %1 {offsets = [1, 0], sizes = [1, 32], strides = [1, 1]} : vector<8x128xf32> to vector<1x32xf32>
    %4 = vector.extract_strided_slice %1 {offsets = [2, 0], sizes = [1, 32], strides = [1, 1]} : vector<8x128xf32> to vector<1x32xf32>
    %5 = vector.extract_strided_slice %1 {offsets = [3, 0], sizes = [1, 32], strides = [1, 1]} : vector<8x128xf32> to vector<1x32xf32>
    %6 = vector.extract_strided_slice %1 {offsets = [4, 0], sizes = [1, 96], strides = [1, 1]} : vector<8x128xf32> to vector<1x96xf32>
    %7 = vector.extract_strided_slice %1 {offsets = [5, 0], sizes = [1, 32], strides = [1, 1]} : vector<8x128xf32> to vector<1x32xf32>
    %8 = vector.extract_strided_slice %1 {offsets = [6, 0], sizes = [1, 32], strides = [1, 1]} : vector<8x128xf32> to vector<1x32xf32>
    %9 = vector.extract_strided_slice %1 {offsets = [7, 0], sizes = [1, 128], strides = [1, 1]} : vector<8x128xf32> to vector<1x128xf32>
    %cst = arith.constant dense<0.000000e+00> : vector<16xf32>
    %10 = vector.multi_reduction <add>, %0, %cst [1] : vector<16x32xf32> to vector<16xf32>
    %11 = vector.shape_cast %10 : vector<16xf32> to vector<16x1xf32>
    %cst_3 = arith.constant 3.200000e+01 : f32
    %12 = vector.broadcast %cst_3 : f32 to vector<16x1xf32>
    %13 = arith.divf %11, %12 : vector<16x1xf32>
    %14 = vector.broadcast %13 : vector<16x1xf32> to vector<16x32xf32>
    %15 = arith.subf %0, %14 : vector<16x32xf32>
    %16 = arith.mulf %15, %15 : vector<16x32xf32>
    %cst_4 = arith.constant dense<0.000000e+00> : vector<16xf32>
    %17 = vector.multi_reduction <add>, %16, %cst_4 [1] : vector<16x32xf32> to vector<16xf32>
    %18 = vector.shape_cast %17 : vector<16xf32> to vector<16x1xf32>
    %cst_5 = arith.constant 3.200000e+01 : f32
    %19 = vector.broadcast %cst_5 : f32 to vector<16x1xf32>
    %20 = arith.divf %18, %19 : vector<16x1xf32>
    %21 = vector.broadcast %13 : vector<16x1xf32> to vector<16x32xf32>
    %22 = arith.subf %0, %21 : vector<16x32xf32>
    %cst_6 = arith.constant 9.99999974E-6 : f32
    %23 = vector.broadcast %cst_6 : f32 to vector<16x1xf32>
    %24 = arith.addf %20, %23 : vector<16x1xf32>
    %25 = math.rsqrt %24 : vector<16x1xf32>
    %26 = vector.broadcast %25 : vector<16x1xf32> to vector<16x32xf32>
    %27 = arith.mulf %22, %26 : vector<16x32xf32>
    %28 = vector.broadcast %2 : vector<1x32xf32> to vector<16x32xf32>
    %29 = arith.mulf %27, %28 : vector<16x32xf32>
    %30 = vector.broadcast %3 : vector<1x32xf32> to vector<16x32xf32>
    %31 = arith.addf %29, %30 : vector<16x32xf32>
    %32 = arith.truncf %31 : vector<16x32xf32> to vector<16x32xbf16>
    %c0_7 = arith.constant 0 : index
    %c0_8 = arith.constant 0 : index
    %33 = vector.load %arg2[%c0_7, %c0_8] : memref<32x96xbf16, #tpu.memory_space<vmem>>, vector<32x96xbf16>
    %cst_9 = arith.constant dense<0.000000e+00> : vector<16x96xf32>
    %34 = tpu.matmul %32, %33, %cst_9 {dimension_numbers = #tpu.dot_dimension_numbers<[1], [0], [0], [1], [0, 0, 1, 1], [], []>} : vector<16x32xbf16>, vector<32x96xbf16>, vector<16x96xf32> -> vector<16x96xf32>
    %35 = vector.broadcast %6 : vector<1x96xf32> to vector<16x96xf32>
    %36 = arith.addf %34, %35 : vector<16x96xf32>
    %37 = vector.shape_cast %36 : vector<16x96xf32> to vector<2x8x96xf32>
    %38 = vector.extract_strided_slice %37 {offsets = [0, 0, 0], sizes = [2, 8, 8], strides = [1, 1, 1]} : vector<2x8x96xf32> to vector<2x8x8xf32>
    %39 = vector.extract_strided_slice %37 {offsets = [0, 0, 8], sizes = [2, 8, 8], strides = [1, 1, 1]} : vector<2x8x96xf32> to vector<2x8x8xf32>
    %40 = vector.extract_strided_slice %37 {offsets = [0, 0, 16], sizes = [2, 8, 8], strides = [1, 1, 1]} : vector<2x8x96xf32> to vector<2x8x8xf32>
    %41 = vector.extract_strided_slice %37 {offsets = [0, 0, 24], sizes = [2, 8, 8], strides = [1, 1, 1]} : vector<2x8x96xf32> to vector<2x8x8xf32>
    %42 = tpu.concatenate %38, %39, %40, %41 in 0 : vector<2x8x8xf32>, vector<2x8x8xf32>, vector<2x8x8xf32>, vector<2x8x8xf32> -> vector<8x8x8xf32>
    %43 = arith.truncf %42 : vector<8x8x8xf32> to vector<8x8x8xbf16>
    %44 = vector.extract_strided_slice %37 {offsets = [0, 0, 32], sizes = [2, 8, 8], strides = [1, 1, 1]} : vector<2x8x96xf32> to vector<2x8x8xf32>
    %45 = vector.extract_strided_slice %37 {offsets = [0, 0, 40], sizes = [2, 8, 8], strides = [1, 1, 1]} : vector<2x8x96xf32> to vector<2x8x8xf32>
    %46 = vector.extract_strided_slice %37 {offsets = [0, 0, 48], sizes = [2, 8, 8], strides = [1, 1, 1]} : vector<2x8x96xf32> to vector<2x8x8xf32>
    %47 = vector.extract_strided_slice %37 {offsets = [0, 0, 56], sizes = [2, 8, 8], strides = [1, 1, 1]} : vector<2x8x96xf32> to vector<2x8x8xf32>
    %48 = tpu.concatenate %44, %45, %46, %47 in 0 : vector<2x8x8xf32>, vector<2x8x8xf32>, vector<2x8x8xf32>, vector<2x8x8xf32> -> vector<8x8x8xf32>
    %49 = arith.truncf %48 : vector<8x8x8xf32> to vector<8x8x8xbf16>
    %50 = vector.extract_strided_slice %37 {offsets = [0, 0, 64], sizes = [2, 8, 8], strides = [1, 1, 1]} : vector<2x8x96xf32> to vector<2x8x8xf32>
    %51 = vector.extract_strided_slice %37 {offsets = [0, 0, 72], sizes = [2, 8, 8], strides = [1, 1, 1]} : vector<2x8x96xf32> to vector<2x8x8xf32>
    %52 = vector.extract_strided_slice %37 {offsets = [0, 0, 80], sizes = [2, 8, 8], strides = [1, 1, 1]} : vector<2x8x96xf32> to vector<2x8x8xf32>
    %53 = vector.extract_strided_slice %37 {offsets = [0, 0, 88], sizes = [2, 8, 8], strides = [1, 1, 1]} : vector<2x8x96xf32> to vector<2x8x8xf32>
    %54 = tpu.concatenate %50, %51, %52, %53 in 0 : vector<2x8x8xf32>, vector<2x8x8xf32>, vector<2x8x8xf32>, vector<2x8x8xf32> -> vector<8x8x8xf32>
    %55 = arith.truncf %54 : vector<8x8x8xf32> to vector<8x8x8xbf16>
    "tpu.trace_start"() <{level = 10 : i32, message = "gqd,gkd->gqk"}> : () -> ()
    %cst_10 = arith.constant dense<0.000000e+00> : vector<8x8x8xf32>
    %56 = tpu.matmul %43, %49, %cst_10 {dimension_numbers = #tpu.dot_dimension_numbers<[2], [2], [1], [1], [0, 0, 0, 1, 1, 1], [0], [0]>} : vector<8x8x8xbf16>, vector<8x8x8xbf16>, vector<8x8x8xf32> -> vector<8x8x8xf32>
    "tpu.trace_stop"() : () -> ()
    %cst_11 = arith.constant 0.353553385 : f32
    %57 = vector.broadcast %cst_11 : f32 to vector<8x8x8xf32>
    %58 = arith.mulf %56, %57 : vector<8x8x8xf32>
    %cst_12 = arith.constant dense<0xFF800000> : vector<8x8xf32>
    %59 = vector.multi_reduction <maximumf>, %58, %cst_12 [2] : vector<8x8x8xf32> to vector<8x8xf32>
    %60 = vector.shape_cast %59 : vector<8x8xf32> to vector<8x8x1xf32>
    %61 = vector.broadcast %60 : vector<8x8x1xf32> to vector<8x8x8xf32>
    %62 = arith.subf %58, %61 : vector<8x8x8xf32>
    %63 = math.exp %62 : vector<8x8x8xf32>
    %cst_13 = arith.constant dense<0.000000e+00> : vector<8x8xf32>
    %64 = vector.multi_reduction <add>, %63, %cst_13 [2] : vector<8x8x8xf32> to vector<8x8xf32>
    %65 = vector.shape_cast %64 : vector<8x8xf32> to vector<8x8x1xf32>
    %66 = tpu.reciprocal %65 {approx = true} : vector<8x8x1xf32> -> vector<8x8x1xf32>
    %67 = vector.broadcast %66 : vector<8x8x1xf32> to vector<8x8x8xf32>
    %68 = arith.mulf %63, %67 : vector<8x8x8xf32>
    %69 = arith.truncf %68 : vector<8x8x8xf32> to vector<8x8x8xbf16>
    "tpu.trace_start"() <{level = 10 : i32, message = "gqk,gkd->gqd"}> : () -> ()
    %cst_14 = arith.constant dense<0.000000e+00> : vector<8x8x8xf32>
    %70 = tpu.matmul %69, %55, %cst_14 {dimension_numbers = #tpu.dot_dimension_numbers<[2], [1], [1], [2], [0, 0, 0, 1, 1, 2], [0], [0]>} : vector<8x8x8xbf16>, vector<8x8x8xbf16>, vector<8x8x8xf32> -> vector<8x8x8xf32>
    "tpu.trace_stop"() : () -> ()
    %71 = vector.extract_strided_slice %70 {offsets = [0, 0, 0], sizes = [2, 8, 8], strides = [1, 1, 1]} : vector<8x8x8xf32> to vector<2x8x8xf32>
    %72 = vector.extract_strided_slice %70 {offsets = [2, 0, 0], sizes = [2, 8, 8], strides = [1, 1, 1]} : vector<8x8x8xf32> to vector<2x8x8xf32>
    %73 = vector.extract_strided_slice %70 {offsets = [4, 0, 0], sizes = [2, 8, 8], strides = [1, 1, 1]} : vector<8x8x8xf32> to vector<2x8x8xf32>
    %74 = vector.extract_strided_slice %70 {offsets = [6, 0, 0], sizes = [2, 8, 8], strides = [1, 1, 1]} : vector<8x8x8xf32> to vector<2x8x8xf32>
    %75 = tpu.concatenate %71, %72, %73, %74 in 2 : vector<2x8x8xf32>, vector<2x8x8xf32>, vector<2x8x8xf32>, vector<2x8x8xf32> -> vector<2x8x32xf32>
    %76 = vector.shape_cast %75 : vector<2x8x32xf32> to vector<16x32xf32>
    %77 = arith.truncf %76 : vector<16x32xf32> to vector<16x32xbf16>
    %c0_15 = arith.constant 0 : index
    %c0_16 = arith.constant 0 : index
    %78 = vector.load %arg3[%c0_15, %c0_16] : memref<32x32xbf16, #tpu.memory_space<vmem>>, vector<32x32xbf16>
    %cst_17 = arith.constant dense<0.000000e+00> : vector<16x32xf32>
    %79 = tpu.matmul %77, %78, %cst_17 {dimension_numbers = #tpu.dot_dimension_numbers<[1], [0], [0], [1], [0, 0, 1, 1], [], []>} : vector<16x32xbf16>, vector<32x32xbf16>, vector<16x32xf32> -> vector<16x32xf32>
    %80 = vector.broadcast %7 : vector<1x32xf32> to vector<16x32xf32>
    %81 = arith.addf %79, %80 : vector<16x32xf32>
    %82 = arith.addf %0, %81 : vector<16x32xf32>
    %cst_18 = arith.constant dense<0.000000e+00> : vector<16xf32>
    %83 = vector.multi_reduction <add>, %82, %cst_18 [1] : vector<16x32xf32> to vector<16xf32>
    %84 = vector.shape_cast %83 : vector<16xf32> to vector<16x1xf32>
    %cst_19 = arith.constant 3.200000e+01 : f32
    %85 = vector.broadcast %cst_19 : f32 to vector<16x1xf32>
    %86 = arith.divf %84, %85 : vector<16x1xf32>
    %87 = vector.broadcast %86 : vector<16x1xf32> to vector<16x32xf32>
    %88 = arith.subf %82, %87 : vector<16x32xf32>
    %89 = arith.mulf %88, %88 : vector<16x32xf32>
    %cst_20 = arith.constant dense<0.000000e+00> : vector<16xf32>
    %90 = vector.multi_reduction <add>, %89, %cst_20 [1] : vector<16x32xf32> to vector<16xf32>
    %91 = vector.shape_cast %90 : vector<16xf32> to vector<16x1xf32>
    %cst_21 = arith.constant 3.200000e+01 : f32
    %92 = vector.broadcast %cst_21 : f32 to vector<16x1xf32>
    %93 = arith.divf %91, %92 : vector<16x1xf32>
    %94 = vector.broadcast %86 : vector<16x1xf32> to vector<16x32xf32>
    %95 = arith.subf %82, %94 : vector<16x32xf32>
    %cst_22 = arith.constant 9.99999974E-6 : f32
    %96 = vector.broadcast %cst_22 : f32 to vector<16x1xf32>
    %97 = arith.addf %93, %96 : vector<16x1xf32>
    %98 = math.rsqrt %97 : vector<16x1xf32>
    %99 = vector.broadcast %98 : vector<16x1xf32> to vector<16x32xf32>
    %100 = arith.mulf %95, %99 : vector<16x32xf32>
    %101 = vector.broadcast %4 : vector<1x32xf32> to vector<16x32xf32>
    %102 = arith.mulf %100, %101 : vector<16x32xf32>
    %103 = vector.broadcast %5 : vector<1x32xf32> to vector<16x32xf32>
    %104 = arith.addf %102, %103 : vector<16x32xf32>
    %105 = arith.truncf %104 : vector<16x32xf32> to vector<16x32xbf16>
    %c0_23 = arith.constant 0 : index
    %c0_24 = arith.constant 0 : index
    %106 = vector.load %arg4[%c0_23, %c0_24] : memref<32x128xbf16, #tpu.memory_space<vmem>>, vector<32x128xbf16>
    %cst_25 = arith.constant dense<0.000000e+00> : vector<16x128xf32>
    %107 = tpu.matmul %105, %106, %cst_25 {dimension_numbers = #tpu.dot_dimension_numbers<[1], [0], [0], [1], [0, 0, 1, 1], [], []>} : vector<16x32xbf16>, vector<32x128xbf16>, vector<16x128xf32> -> vector<16x128xf32>
    %108 = vector.broadcast %9 : vector<1x128xf32> to vector<16x128xf32>
    %109 = arith.addf %107, %108 : vector<16x128xf32>
    %cst_26 = arith.constant 5.000000e-01 : f32
    %110 = vector.broadcast %cst_26 : f32 to vector<16x128xf32>
    %111 = arith.mulf %110, %109 : vector<16x128xf32>
    %cst_27 = arith.constant 4.471500e-02 : f32
    %112 = vector.broadcast %cst_27 : f32 to vector<16x128xf32>
    %113 = arith.mulf %112, %109 : vector<16x128xf32>
    %114 = arith.mulf %113, %109 : vector<16x128xf32>
    %115 = arith.mulf %114, %109 : vector<16x128xf32>
    %116 = arith.addf %109, %115 : vector<16x128xf32>
    %cst_28 = arith.constant 0.797884583 : f32
    %117 = vector.broadcast %cst_28 : f32 to vector<16x128xf32>
    %118 = arith.mulf %117, %116 : vector<16x128xf32>
    %119 = math.tanh %118 : vector<16x128xf32>
    %cst_29 = arith.constant 1.000000e+00 : f32
    %120 = vector.broadcast %cst_29 : f32 to vector<16x128xf32>
    %121 = arith.addf %120, %119 : vector<16x128xf32>
    %122 = arith.mulf %111, %121 : vector<16x128xf32>
    %123 = arith.truncf %122 : vector<16x128xf32> to vector<16x128xbf16>
    %c0_30 = arith.constant 0 : index
    %c0_31 = arith.constant 0 : index
    %124 = vector.load %arg5[%c0_30, %c0_31] : memref<128x32xbf16, #tpu.memory_space<vmem>>, vector<128x32xbf16>
    %cst_32 = arith.constant dense<0.000000e+00> : vector<16x32xf32>
    %125 = tpu.matmul %123, %124, %cst_32 {dimension_numbers = #tpu.dot_dimension_numbers<[1], [0], [0], [1], [0, 0, 1, 1], [], []>} : vector<16x128xbf16>, vector<128x32xbf16>, vector<16x32xf32> -> vector<16x32xf32>
    %126 = vector.broadcast %8 : vector<1x32xf32> to vector<16x32xf32>
    %127 = arith.addf %125, %126 : vector<16x32xf32>
    %128 = arith.addf %82, %127 : vector<16x32xf32>
    %c0_33 = arith.constant 0 : index
    %c0_34 = arith.constant 0 : index
    %129 = vector.load %arg6[%c0_33, %c0_34] : memref<16x32xf32, #tpu.memory_space<vmem>>, vector<16x32xf32>
    tpu.vector_store %arg6[%c0_33, %c0_34], %128 {strides = array<i32>} : memref<16x32xf32, #tpu.memory_space<vmem>>, vector<16x32xf32>,
    return
  }
}

</mosaic_0001>

<llo_original>
// kernel: tpu_custom_call.1
$region0: #{tpu_custom_call.1}
  #allocation0 [shape = 'u32[]', space=smem, size = 0x4, offset = 0x4, fixed_abs, tag = 'smem constant byte address 0x4 - core index']
  #allocation1 [shape = 'u32[72,128]{1,0:T(1,128)}', space=vmem, size = 0x9000, scoped, tag = 'internal scratch']
  %s0 = inlined_call_operand.vmem [shape: f32[16,32], index: 0, kind: input, shape index: {}]
  %s1 = inlined_call_operand.vmem [shape: f32[8,128], index: 1, kind: input, shape index: {}]
  %s2 = inlined_call_operand.vmem [shape: bf16[32,96], index: 2, kind: input, shape index: {}]
  %s3 = inlined_call_operand.vmem [shape: bf16[32,32], index: 3, kind: input, shape index: {}]
  %s4 = inlined_call_operand.vmem [shape: bf16[32,128], index: 4, kind: input, shape index: {}]
  %s5 = inlined_call_operand.vmem [shape: bf16[128,32], index: 5, kind: input, shape index: {}]
  %s6 = inlined_call_operand.hbm [shape: f32[16,32], index: 6, kind: output, shape index: {}]
  %s7 = sld [smem:[#allocation0]]
  $region34: #{tpu_custom_call.1} parent=0
    _
  %s9 = ssub.s32 1, %s7
  %s10 = scalar_select 0, %s9, %s7
  $region1: #{tpu_custom_call.1} parent=0
    #allocation2 [shape = 'u8[8192]{0}', space=vmem, size = 0x2000, scoped, tag = 'output window, operand 0, single buffered']
    #allocation3 [shape = 's32[1]{0}', space=sflag, size = 0x4, scoped, tag = 'scoped memory for tpu_custom_call.1']
    %11 = vsyncpa [#allocation3], 0
    // Predicated region
    $region2: #{tpu_custom_call.1} parent=1 // pred_check
      _
    $region3: #{tpu_custom_call.1} parent=1 // pred_check_branch
      %13 = sbr.rel (0) target = $region5
    $region4: #{tpu_custom_call.1} parent=1 // pred_region
      _
    $region5: #{tpu_custom_call.1} parent=1 // pred_fallthru
      _
    // Predicated region
    $region6: #{tpu_custom_call.1} parent=1 // pred_check
      _
    $region7: #{tpu_custom_call.1} parent=1 // pred_check_branch
      %15 = sbr.rel (0) target = $region9
    $region8: #{tpu_custom_call.1} parent=1 // pred_region
      _
    $region9: #{tpu_custom_call.1} parent=1 // pred_fallthru
      _
    // Predicated region
    $region10: #{tpu_custom_call.1} parent=1 // pred_check
      _
    $region11: #{tpu_custom_call.1} parent=1 // pred_check_branch
      %17 = sbr.rel (0) target = $region13
    $region12: #{tpu_custom_call.1} parent=1 // pred_region
      _
    $region13: #{tpu_custom_call.1} parent=1 // pred_fallthru
      _
    // Predicated region
    $region14: #{tpu_custom_call.1} parent=1 // pred_check
      _
    $region15: #{tpu_custom_call.1} parent=1 // pred_check_branch
      %19 = sbr.rel (0) target = $region17
    $region16: #{tpu_custom_call.1} parent=1 // pred_region
      _
    $region17: #{tpu_custom_call.1} parent=1 // pred_fallthru
      _
    // Predicated region
    $region18: #{tpu_custom_call.1} parent=1 // pred_check
      _
    $region19: #{tpu_custom_call.1} parent=1 // pred_check_branch
      %21 = sbr.rel (0) target = $region21
    $region20: #{tpu_custom_call.1} parent=1 // pred_region
      _
    $region21: #{tpu_custom_call.1} parent=1 // pred_fallthru
      _
    // Predicated region
    $region22: #{tpu_custom_call.1} parent=1 // pred_check
      _
    $region23: #{tpu_custom_call.1} parent=1 // pred_check_branch
      %23 = sbr.rel (0) target = $region25
    $region24: #{tpu_custom_call.1} parent=1 // pred_region
      _
    $region25: #{tpu_custom_call.1} parent=1 // pred_fallthru
      _
    %v25 = vld [vmem:[%s0] sm:$0xff]
    %v26 = vld [vmem:[%s0 + $0x8] sm:$0xff]
    %v27 = vld [vmem:[%s1] sm:$0xff]
    %vm28 = vcmask 261120
    %v29 = vsel %vm28, %v25, 0.0
    %30 = vadd.xlane.f32.xlu0 %v29
    %v31 = vpop.xlane.xlu0 %30
    %v32 = vsel %vm28, %v26, 0.0
    %33 = vadd.xlane.f32.xlu0 %v32
    %v34 = vpop.xlane.xlu0 %33
    %v35 = vrcp.pop 32.0
    %v36 = vmul.f32 32.0, %v35
    %v37 = vsub.f32 1.0, %v36
    %v38 = vmul.f32 %v35, %v37
    %v39 = vadd.f32 %v35, %v38
    %vm40 = vweird.f32 %v35
    %v41 = vsel %vm40, %v35, %v39
    %v42 = vmul.f32 %v31, %v41
    %v43 = vmul.f32 %v34, %v41
    %v44 = vsub.f32 %v25, %v42
    %v45 = vsub.f32 %v26, %v43
    %v46 = vmul.f32 %v44, %v44
    %v47 = vmul.f32 %v45, %v45
    %v48 = vsel %vm28, %v46, 0.0
    %49 = vadd.xlane.f32.xlu0 %v48
    %v50 = vpop.xlane.xlu0 %49
    %v51 = vsel %vm28, %v47, 0.0
    %52 = vadd.xlane.f32.xlu0 %v51
    %v53 = vpop.xlane.xlu0 %52
    %v54 = vmul.f32 %v50, %v41
    %v55 = vmul.f32 %v53, %v41
    %v56 = vadd.f32 %v54, 1e-05
    %v57 = vadd.f32 %v55, 1e-05
    %v58 = vrsqrt.pop %v56
    %v59 = vmul.f32 %v58, %v56
    %v60 = vmul.f32 %v59, %v58
    %v61 = vmul.f32 0.5, %v60
    %v62 = vsub.f32 1.5, %v61
    %v63 = vmul.f32 %v58, %v62
    %vm64 = vweird.f32 %v56
    %vm65 = vweird.f32 %v58
    %vm66 = vmor %vm64, %vm65
    %v67 = vsel %vm66, %v58, %v63
    %v68 = vrsqrt.pop %v57
    %v69 = vmul.f32 %v68, %v57
    %v70 = vmul.f32 %v69, %v68
    %v71 = vmul.f32 0.5, %v70
    %v72 = vsub.f32 1.5, %v71
    %v73 = vmul.f32 %v68, %v72
    %vm74 = vweird.f32 %v57
    %vm75 = vweird.f32 %v68
    %vm76 = vmor %vm74, %vm75
    %v77 = vsel %vm76, %v68, %v73
    %v78 = vmul.f32 %v44, %v67
    %v79 = vmul.f32 %v45, %v77
    %v80 = vperm.slane %v27, 0
    %v81 = vmul.f32 %v78, %v80
    %v82 = vmul.f32 %v79, %v80
    %v83 = vperm.slane %v27, 1
    %v84 = vadd.f32 %v81, %v83
    %v85 = vadd.f32 %v82, %v83
    %v86 = vpack.c.bf16 %v85, %v84
    %v87 = vld [vmem:[%s2] sm:$0xf]
    %v88 = vld [vmem:[%s2 + $0x4] sm:$0xf]
    %v89 = vld [vmem:[%s2 + $0x8] sm:$0xf]
    %v90 = vld [vmem:[%s2 + $0xc] sm:$0xf]
    %v91 = vperm.slane %v27, 4
    %v96 = vunpack.c.l.b16 %v87
    %v97 = vunpack.c.l.b16 %v88
    %v98 = vunpack.c.l.b16 %v89
    %v99 = vunpack.c.l.b16 %v90
    %v100 = vpack.c.b16 %v97, %v96
    %v101 = vpack.c.b16 %v99, %v98
    %v105 = vsel %vm28, %v86, 0
    %107 = vmatpush.bf16.msra.mxu0 0
    %108 = vmatpush.bf16.msra.mxu0 0
    %109 = vmatpush.bf16.msra.mxu0 0
    %110 = vmatpush.bf16.msra.mxu0 0
    %111 = vmatpush.bf16.msra.mxu0 0
    %112 = vmatpush.bf16.msra.mxu0 0
    %113 = vmatpush.bf16.msra.mxu0 %v101
    %114 = vmatpush.bf16.msra.mxu0 %v100
    %115 = vmatmul.bf16.gmra.mxu0 %v105
    %v116 = vpop.f32.mrf.mxu0
    %v117 = vadd.f32 %v91, %v116
    %v118 = vpop.f32.mrf.mxu0
    %v119 = vadd.f32 %v91, %v118
    %120 = vdwg.mxu0
    %123 = vrot.lane.b32.xlu0 %v117, 120
    %v124 = vpop.permute.xlu0 %123
    %125 = vrot.lane.b32.xlu0 %v119, 120
    %v126 = vpop.permute.xlu0 %125
    %129 = vrot.lane.b32.xlu0 %v117, 112
    %v130 = vpop.permute.xlu0 %129
    %131 = vrot.lane.b32.xlu0 %v119, 112
    %v132 = vpop.permute.xlu0 %131
    %135 = vrot.lane.b32.xlu0 %v117, 104
    %v136 = vpop.permute.xlu0 %135
    %137 = vrot.lane.b32.xlu0 %v119, 104
    %v138 = vpop.permute.xlu0 %137
    %v141 = vpack.c.bf16 %v117, %v117
    %v142 = vpack.c.bf16 %v119, %v119
    %v143 = vpack.c.bf16 %v124, %v124
    %v144 = vpack.c.bf16 %v126, %v126
    %v145 = vpack.c.bf16 %v130, %v130
    %v146 = vpack.c.bf16 %v132, %v132
    %v147 = vpack.c.bf16 %v136, %v136
    %v148 = vpack.c.bf16 %v138, %v138
    %v150 = vunpack.c.l.b16 %v141
    %v151 = vpack.c.b16 %v150, %v150
    %152 = vrot.lane.b32.xlu0 %v151, 96
    %v153 = vpop.permute.xlu0 %152
    %vm154 = vcmask 64512
    %v156 = vsel %vm154, %v141, 0
    %v159 = vsel %vm154, %v153, 0
    %161 = vmatpush.bf16.xpose.msra.mxu0 0
    %162 = vmatpush.bf16.xpose.msra.mxu0 0
    %163 = vmatpush.bf16.xpose.msra.mxu0 0
    %164 = vmatpush.bf16.xpose.msra.mxu0 0
    %165 = vmatpush.bf16.xpose.msra.mxu0 0
    %166 = vmatpush.bf16.xpose.msra.mxu0 0
    %167 = vmatpush.bf16.xpose.msra.mxu0 0
    %168 = vmatpush.bf16.xpose.msra.mxu0 %v159
    %169 = vmatmul.bf16.gmra.mxu0 %v156
    %v170 = vpop.f32.mrf.mxu0
    %v171 = vadd.f32 0.0, %v170
    %v172 = vpop.f32.mrf.mxu0
    %173 = vdwg.mxu0
    %v175 = vunpack.c.l.b16 %v142
    %v176 = vpack.c.b16 %v175, %v175
    %177 = vrot.lane.b32.xlu0 %v176, 96
    %v178 = vpop.permute.xlu0 %177
    %v180 = vsel %vm154, %v142, 0
    %v183 = vsel %vm154, %v178, 0
    %185 = vmatpush.bf16.xpose.msra.mxu0 0
    %186 = vmatpush.bf16.xpose.msra.mxu0 0
    %187 = vmatpush.bf16.xpose.msra.mxu0 0
    %188 = vmatpush.bf16.xpose.msra.mxu0 0
    %189 = vmatpush.bf16.xpose.msra.mxu0 0
    %190 = vmatpush.bf16.xpose.msra.mxu0 0
    %191 = vmatpush.bf16.xpose.msra.mxu0 0
    %192 = vmatpush.bf16.xpose.msra.mxu0 %v183
    %193 = vmatmul.bf16.gmra.mxu0 %v180
    %v194 = vpop.f32.mrf.mxu0
    %v195 = vadd.f32 0.0, %v194
    %v196 = vpop.f32.mrf.mxu0
    %197 = vdwg.mxu0
    %v199 = vunpack.c.l.b16 %v143
    %v200 = vpack.c.b16 %v199, %v199
    %201 = vrot.lane.b32.xlu0 %v200, 96
    %v202 = vpop.permute.xlu0 %201
    %v204 = vsel %vm154, %v143, 0
    %v207 = vsel %vm154, %v202, 0
    %209 = vmatpush.bf16.xpose.msra.mxu0 0
    %210 = vmatpush.bf16.xpose.msra.mxu0 0
    %211 = vmatpush.bf16.xpose.msra.mxu0 0
    %212 = vmatpush.bf16.xpose.msra.mxu0 0
    %213 = vmatpush.bf16.xpose.msra.mxu0 0
    %214 = vmatpush.bf16.xpose.msra.mxu0 0
    %215 = vmatpush.bf16.xpose.msra.mxu0 0
    %216 = vmatpush.bf16.xpose.msra.mxu0 %v207
    %217 = vmatmul.bf16.gmra.mxu0 %v204
    %v218 = vpop.f32.mrf.mxu0
    %v219 = vadd.f32 0.0, %v218
    %v220 = vpop.f32.mrf.mxu0
    %221 = vdwg.mxu0
    %v223 = vunpack.c.l.b16 %v144
    %v224 = vpack.c.b16 %v223, %v223
    %225 = vrot.lane.b32.xlu0 %v224, 96
    %v226 = vpop.permute.xlu0 %225
    %v228 = vsel %vm154, %v144, 0
    %v231 = vsel %vm154, %v226, 0
    %233 = vmatpush.bf16.xpose.msra.mxu0 0
    %234 = vmatpush.bf16.xpose.msra.mxu0 0
    %235 = vmatpush.bf16.xpose.msra.mxu0 0
    %236 = vmatpush.bf16.xpose.msra.mxu0 0
    %237 = vmatpush.bf16.xpose.msra.mxu0 0
    %238 = vmatpush.bf16.xpose.msra.mxu0 0
    %239 = vmatpush.bf16.xpose.msra.mxu0 0
    %240 = vmatpush.bf16.xpose.msra.mxu0 %v231
    %241 = vmatmul.bf16.gmra.mxu0 %v228
    %v242 = vpop.f32.mrf.mxu0
    %v243 = vadd.f32 0.0, %v242
    %v244 = vpop.f32.mrf.mxu0
    %245 = vdwg.mxu0
    %v247 = vunpack.c.l.b16 %v145
    %v248 = vpack.c.b16 %v247, %v247
    %249 = vrot.lane.b32.xlu0 %v248, 96
    %v250 = vpop.permute.xlu0 %249
    %v252 = vsel %vm154, %v145, 0
    %v255 = vsel %vm154, %v250, 0
    %257 = vmatpush.bf16.xpose.msra.mxu0 0
    %258 = vmatpush.bf16.xpose.msra.mxu0 0
    %259 = vmatpush.bf16.xpose.msra.mxu0 0
    %260 = vmatpush.bf16.xpose.msra.mxu0 0
    %261 = vmatpush.bf16.xpose.msra.mxu0 0
    %262 = vmatpush.bf16.xpose.msra.mxu0 0
    %263 = vmatpush.bf16.xpose.msra.mxu0 0
    %264 = vmatpush.bf16.xpose.msra.mxu0 %v255
    %265 = vmatmul.bf16.gmra.mxu0 %v252
    %v266 = vpop.f32.mrf.mxu0
    %v267 = vadd.f32 0.0, %v266
    %v268 = vpop.f32.mrf.mxu0
    %269 = vdwg.mxu0
    %v271 = vunpack.c.l.b16 %v146
    %v272 = vpack.c.b16 %v271, %v271
    %273 = vrot.lane.b32.xlu0 %v272, 96
    %v274 = vpop.permute.xlu0 %273
    %v276 = vsel %vm154, %v146, 0
    %v279 = vsel %vm154, %v274, 0
    %281 = vmatpush.bf16.xpose.msra.mxu0 0
    %282 = vmatpush.bf16.xpose.msra.mxu0 0
    %283 = vmatpush.bf16.xpose.msra.mxu0 0
    %284 = vmatpush.bf16.xpose.msra.mxu0 0
    %285 = vmatpush.bf16.xpose.msra.mxu0 0
    %286 = vmatpush.bf16.xpose.msra.mxu0 0
    %287 = vmatpush.bf16.xpose.msra.mxu0 0
    %288 = vmatpush.bf16.xpose.msra.mxu0 %v279
    %289 = vmatmul.bf16.gmra.mxu0 %v276
    %v290 = vpop.f32.mrf.mxu0
    %v291 = vadd.f32 0.0, %v290
    %v292 = vpop.f32.mrf.mxu0
    %293 = vdwg.mxu0
    %v295 = vunpack.c.l.b16 %v147
    %v296 = vpack.c.b16 %v295, %v295
    %297 = vrot.lane.b32.xlu0 %v296, 96
    %v298 = vpop.permute.xlu0 %297
    %v300 = vsel %vm154, %v147, 0
    %v303 = vsel %vm154, %v298, 0
    %305 = vmatpush.bf16.xpose.msra.mxu0 0
    %306 = vmatpush.bf16.xpose.msra.mxu0 0
    %307 = vmatpush.bf16.xpose.msra.mxu0 0
    %308 = vmatpush.bf16.xpose.msra.mxu0 0
    %309 = vmatpush.bf16.xpose.msra.mxu0 0
    %310 = vmatpush.bf16.xpose.msra.mxu0 0
    %311 = vmatpush.bf16.xpose.msra.mxu0 0
    %312 = vmatpush.bf16.xpose.msra.mxu0 %v303
    %313 = vmatmul.bf16.gmra.mxu0 %v300
    %v314 = vpop.f32.mrf.mxu0
    %v315 = vadd.f32 0.0, %v314
    %v316 = vpop.f32.mrf.mxu0
    %317 = vdwg.mxu0
    %v319 = vunpack.c.l.b16 %v148
    %v320 = vpack.c.b16 %v319, %v319
    %321 = vrot.lane.b32.xlu0 %v320, 96
    %v322 = vpop.permute.xlu0 %321
    %v324 = vsel %vm154, %v148, 0
    %v327 = vsel %vm154, %v322, 0
    %329 = vmatpush.bf16.xpose.msra.mxu0 0
    %330 = vmatpush.bf16.xpose.msra.mxu0 0
    %331 = vmatpush.bf16.xpose.msra.mxu0 0
    %332 = vmatpush.bf16.xpose.msra.mxu0 0
    %333 = vmatpush.bf16.xpose.msra.mxu0 0
    %334 = vmatpush.bf16.xpose.msra.mxu0 0
    %335 = vmatpush.bf16.xpose.msra.mxu0 0
    %336 = vmatpush.bf16.xpose.msra.mxu0 %v327
    %337 = vmatmul.bf16.gmra.mxu0 %v324
    %v338 = vpop.f32.mrf.mxu0
    %v339 = vadd.f32 0.0, %v338
    %v340 = vpop.f32.mrf.mxu0
    %341 = vdwg.mxu0
    %v342 = vmul.f32 %v171, 0.35355338
    %v343 = vmul.f32 %v195, 0.35355338
    %v344 = vmul.f32 %v219, 0.35355338
    %v345 = vmul.f32 %v243, 0.35355338
    %v346 = vmul.f32 %v267, 0.35355338
    %v347 = vmul.f32 %v291, 0.35355338
    %v348 = vmul.f32 %v315, 0.35355338
    %v349 = vmul.f32 %v339, 0.35355338
    %v350 = vsel %vm154, %v342, -inf
    %351 = vmax.xlane.f32.xlu0 %v350
    %v352 = vpop.xlane.xlu0 %351
    %v353 = vsel %vm154, %v343, -inf
    %354 = vmax.xlane.f32.xlu0 %v353
    %v355 = vpop.xlane.xlu0 %354
    %v356 = vsel %vm154, %v344, -inf
    %357 = vmax.xlane.f32.xlu0 %v356
    %v358 = vpop.xlane.xlu0 %357
    %v359 = vsel %vm154, %v345, -inf
    %360 = vmax.xlane.f32.xlu0 %v359
    %v361 = vpop.xlane.xlu0 %360
    %v362 = vsel %vm154, %v346, -inf
    %363 = vmax.xlane.f32.xlu0 %v362
    %v364 = vpop.xlane.xlu0 %363
    %v365 = vsel %vm154, %v347, -inf
    %366 = vmax.xlane.f32.xlu0 %v365
    %v367 = vpop.xlane.xlu0 %366
    %v368 = vsel %vm154, %v348, -inf
    %369 = vmax.xlane.f32.xlu0 %v368
    %v370 = vpop.xlane.xlu0 %369
    %v371 = vsel %vm154, %v349, -inf
    %372 = vmax.xlane.f32.xlu0 %v371
    %v373 = vpop.xlane.xlu0 %372
    %v374 = vsub.f32 %v342, %v352
    %v375 = vsub.f32 %v343, %v355
    %v376 = vsub.f32 %v344, %v358
    %v377 = vsub.f32 %v345, %v361
    %v378 = vsub.f32 %v346, %v364
    %v379 = vsub.f32 %v347, %v367
    %v380 = vsub.f32 %v348, %v370
    %v381 = vsub.f32 %v349, %v373
    %v382 = vmul.f32 %v374, 1.442695
    %v383 = vpow.pop %v382
    %v384 = vmul.f32 %v375, 1.442695
    %v385 = vpow.pop %v384
    %v386 = vmul.f32 %v376, 1.442695
    %v387 = vpow.pop %v386
    %v388 = vmul.f32 %v377, 1.442695
    %v389 = vpow.pop %v388
    %v390 = vmul.f32 %v378, 1.442695
    %v391 = vpow.pop %v390
    %v392 = vmul.f32 %v379, 1.442695
    %v393 = vpow.pop %v392
    %v394 = vmul.f32 %v380, 1.442695
    %v395 = vpow.pop %v394
    %v396 = vmul.f32 %v381, 1.442695
    %v397 = vpow.pop %v396
    %v398 = vsel %vm154, %v383, 0.0
    %399 = vadd.xlane.f32.xlu0 %v398
    %v400 = vpop.xlane.xlu0 %399
    %v401 = vsel %vm154, %v385, 0.0
    %402 = vadd.xlane.f32.xlu0 %v401
    %v403 = vpop.xlane.xlu0 %402
    %v404 = vsel %vm154, %v387, 0.0
    %405 = vadd.xlane.f32.xlu0 %v404
    %v406 = vpop.xlane.xlu0 %405
    %v407 = vsel %vm154, %v389, 0.0
    %408 = vadd.xlane.f32.xlu0 %v407
    %v409 = vpop.xlane.xlu0 %408
    %v410 = vsel %vm154, %v391, 0.0
    %411 = vadd.xlane.f32.xlu0 %v410
    %v412 = vpop.xlane.xlu0 %411
    %v413 = vsel %vm154, %v393, 0.0
    %414 = vadd.xlane.f32.xlu0 %v413
    %v415 = vpop.xlane.xlu0 %414
    %v416 = vsel %vm154, %v395, 0.0
    %417 = vadd.xlane.f32.xlu0 %v416
    %v418 = vpop.xlane.xlu0 %417
    %v419 = vsel %vm154, %v397, 0.0
    %420 = vadd.xlane.f32.xlu0 %v419
    %v421 = vpop.xlane.xlu0 %420
    %v422 = vrcp.pop %v400
    %v423 = vrcp.pop %v403
    %v424 = vrcp.pop %v406
    %v425 = vrcp.pop %v409
    %v426 = vrcp.pop %v412
    %v427 = vrcp.pop %v415
    %v428 = vrcp.pop %v418
    %v429 = vrcp.pop %v421
    %v430 = vmul.f32 %v383, %v422
    %v431 = vmul.f32 %v385, %v423
    %v432 = vmul.f32 %v387, %v424
    %v433 = vmul.f32 %v389, %v425
    %v434 = vmul.f32 %v391, %v426
    %v435 = vmul.f32 %v393, %v427
    %v436 = vmul.f32 %v395, %v428
    %v437 = vmul.f32 %v397, %v429
    %v438 = vpack.c.bf16 %v430, %v430
    %v439 = vpack.c.bf16 %v431, %v431
    %v440 = vpack.c.bf16 %v432, %v432
    %v441 = vpack.c.bf16 %v433, %v433
    %v442 = vpack.c.bf16 %v434, %v434
    %v443 = vpack.c.bf16 %v435, %v435
    %v444 = vpack.c.bf16 %v436, %v436
    %v445 = vpack.c.bf16 %v437, %v437
    %446 = vrot.lane.b32.xlu0 %v151, 64
    %v447 = vpop.permute.xlu0 %446
    %v449 = vsel %vm154, %v438, 0
    %vm451 = vcmask 1043456
    %v453 = vsel %vm451, %v447, 0
    %455 = vmatpush.bf16.msra.mxu0 0
    %456 = vmatpush.bf16.msra.mxu0 0
    %457 = vmatpush.bf16.msra.mxu0 0
    %458 = vmatpush.bf16.msra.mxu0 0
    %459 = vmatpush.bf16.msra.mxu0 0
    %460 = vmatpush.bf16.msra.mxu0 0
    %461 = vmatpush.bf16.msra.mxu0 0
    %462 = vmatpush.bf16.msra.mxu0 %v453
    %463 = vmatmul.bf16.gmra.mxu0 %v449
    %v464 = vpop.f32.mrf.mxu0
    %v465 = vadd.f32 0.0, %v464
    %v466 = vpop.f32.mrf.mxu0
    %467 = vdwg.mxu0
    %468 = vrot.lane.b32.xlu0 %v176, 64
    %v469 = vpop.permute.xlu0 %468
    %v471 = vsel %vm154, %v439, 0
    %v474 = vsel %vm451, %v469, 0
    %476 = vmatpush.bf16.msra.mxu0 0
    %477 = vmatpush.bf16.msra.mxu0 0
    %478 = vmatpush.bf16.msra.mxu0 0
    %479 = vmatpush.bf16.msra.mxu0 0
    %480 = vmatpush.bf16.msra.mxu0 0
    %481 = vmatpush.bf16.msra.mxu0 0
    %482 = vmatpush.bf16.msra.mxu0 0
    %483 = vmatpush.bf16.msra.mxu0 %v474
    %484 = vmatmul.bf16.gmra.mxu0 %v471
    %v485 = vpop.f32.mrf.mxu0
    %v486 = vadd.f32 0.0, %v485
    %v487 = vpop.f32.mrf.mxu0
    %488 = vdwg.mxu0
    %489 = vrot.lane.b32.xlu0 %v200, 64
    %v490 = vpop.permute.xlu0 %489
    %v492 = vsel %vm154, %v440, 0
    %v495 = vsel %vm451, %v490, 0
    %497 = vmatpush.bf16.msra.mxu0 0
    %498 = vmatpush.bf16.msra.mxu0 0
    %499 = vmatpush.bf16.msra.mxu0 0
    %500 = vmatpush.bf16.msra.mxu0 0
    %501 = vmatpush.bf16.msra.mxu0 0
    %502 = vmatpush.bf16.msra.mxu0 0
    %503 = vmatpush.bf16.msra.mxu0 0
    %504 = vmatpush.bf16.msra.mxu0 %v495
    %505 = vmatmul.bf16.gmra.mxu0 %v492
    %v506 = vpop.f32.mrf.mxu0
    %v507 = vadd.f32 0.0, %v506
    %v508 = vpop.f32.mrf.mxu0
    %509 = vdwg.mxu0
    %510 = vrot.lane.b32.xlu0 %v224, 64
    %v511 = vpop.permute.xlu0 %510
    %v513 = vsel %vm154, %v441, 0
    %v516 = vsel %vm451, %v511, 0
    %518 = vmatpush.bf16.msra.mxu0 0
    %519 = vmatpush.bf16.msra.mxu0 0
    %520 = vmatpush.bf16.msra.mxu0 0
    %521 = vmatpush.bf16.msra.mxu0 0
    %522 = vmatpush.bf16.msra.mxu0 0
    %523 = vmatpush.bf16.msra.mxu0 0
    %524 = vmatpush.bf16.msra.mxu0 0
    %525 = vmatpush.bf16.msra.mxu0 %v516
    %526 = vmatmul.bf16.gmra.mxu0 %v513
    %v527 = vpop.f32.mrf.mxu0
    %v528 = vadd.f32 0.0, %v527
    %v529 = vpop.f32.mrf.mxu0
    %530 = vdwg.mxu0
    %531 = vrot.lane.b32.xlu0 %v248, 64
    %v532 = vpop.permute.xlu0 %531
    %v534 = vsel %vm154, %v442, 0
    %v537 = vsel %vm451, %v532, 0
    %539 = vmatpush.bf16.msra.mxu0 0
    %540 = vmatpush.bf16.msra.mxu0 0
    %541 = vmatpush.bf16.msra.mxu0 0
    %542 = vmatpush.bf16.msra.mxu0 0
    %543 = vmatpush.bf16.msra.mxu0 0
    %544 = vmatpush.bf16.msra.mxu0 0
    %545 = vmatpush.bf16.msra.mxu0 0
    %546 = vmatpush.bf16.msra.mxu0 %v537
    %547 = vmatmul.bf16.gmra.mxu0 %v534
    %v548 = vpop.f32.mrf.mxu0
    %v549 = vadd.f32 0.0, %v548
    %v550 = vpop.f32.mrf.mxu0
    %551 = vdwg.mxu0
    %552 = vrot.lane.b32.xlu0 %v272, 64
    %v553 = vpop.permute.xlu0 %552
    %v555 = vsel %vm154, %v443, 0
    %v558 = vsel %vm451, %v553, 0
    %560 = vmatpush.bf16.msra.mxu0 0
    %561 = vmatpush.bf16.msra.mxu0 0
    %562 = vmatpush.bf16.msra.mxu0 0
    %563 = vmatpush.bf16.msra.mxu0 0
    %564 = vmatpush.bf16.msra.mxu0 0
    %565 = vmatpush.bf16.msra.mxu0 0
    %566 = vmatpush.bf16.msra.mxu0 0
    %567 = vmatpush.bf16.msra.mxu0 %v558
    %568 = vmatmul.bf16.gmra.mxu0 %v555
    %v569 = vpop.f32.mrf.mxu0
    %v570 = vadd.f32 0.0, %v569
    %v571 = vpop.f32.mrf.mxu0
    %572 = vdwg.mxu0
    %573 = vrot.lane.b32.xlu0 %v296, 64
    %v574 = vpop.permute.xlu0 %573
    %v576 = vsel %vm154, %v444, 0
    %v579 = vsel %vm451, %v574, 0
    %581 = vmatpush.bf16.msra.mxu0 0
    %582 = vmatpush.bf16.msra.mxu0 0
    %583 = vmatpush.bf16.msra.mxu0 0
    %584 = vmatpush.bf16.msra.mxu0 0
    %585 = vmatpush.bf16.msra.mxu0 0
    %586 = vmatpush.bf16.msra.mxu0 0
    %587 = vmatpush.bf16.msra.mxu0 0
    %588 = vmatpush.bf16.msra.mxu0 %v579
    %589 = vmatmul.bf16.gmra.mxu0 %v576
    %v590 = vpop.f32.mrf.mxu0
    %v591 = vadd.f32 0.0, %v590
    %v592 = vpop.f32.mrf.mxu0
    %593 = vdwg.mxu0
    %594 = vrot.lane.b32.xlu0 %v320, 64
    %v595 = vpop.permute.xlu0 %594
    %v597 = vsel %vm154, %v445, 0
    %v600 = vsel %vm451, %v595, 0
    %602 = vmatpush.bf16.msra.mxu0 0
    %603 = vmatpush.bf16.msra.mxu0 0
    %604 = vmatpush.bf16.msra.mxu0 0
    %605 = vmatpush.bf16.msra.mxu0 0
    %606 = vmatpush.bf16.msra.mxu0 0
    %607 = vmatpush.bf16.msra.mxu0 0
    %608 = vmatpush.bf16.msra.mxu0 0
    %609 = vmatpush.bf16.msra.mxu0 %v600
    %610 = vmatmul.bf16.gmra.mxu0 %v597
    %v611 = vpop.f32.mrf.mxu0
    %v612 = vadd.f32 0.0, %v611
    %v613 = vpop.f32.mrf.mxu0
    %614 = vdwg.mxu0
    %617 = vrot.lane.b32.xlu0 %v507, 8
    %v618 = vpop.permute.xlu0 %617
    %619 = vrot.lane.b32.xlu0 %v528, 8
    %v620 = vpop.permute.xlu0 %619
    %625 = vrot.lane.b32.xlu0 %v549, 16
    %v626 = vpop.permute.xlu0 %625
    %627 = vrot.lane.b32.xlu0 %v570, 16
    %v628 = vpop.permute.xlu0 %627
    %633 = vrot.lane.b32.xlu0 %v591, 24
    %v634 = vpop.permute.xlu0 %633
    %635 = vrot.lane.b32.xlu0 %v612, 24
    %v636 = vpop.permute.xlu0 %635
    %v639 = vsel %vm154, %v465, %v618
    %v640 = vsel %vm154, %v486, %v620
    %vm641 = vcmask 130048
    %v642 = vsel %vm641, %v639, %v626
    %v643 = vsel %vm641, %v640, %v628
    %vm644 = vcmask 195584
    %v645 = vsel %vm644, %v642, %v634
    %v646 = vsel %vm644, %v643, %v636
    %v647 = vpack.c.bf16 %v646, %v645
    %v648 = vld [vmem:[%s3] sm:$0xf]
    %v649 = vld [vmem:[%s3 + $0x4] sm:$0xf]
    %v650 = vld [vmem:[%s3 + $0x8] sm:$0xf]
    %v651 = vld [vmem:[%s3 + $0xc] sm:$0xf]
    %v652 = vperm.slane %v27, 5
    %v657 = vunpack.c.l.b16 %v648
    %v658 = vunpack.c.l.b16 %v649
    %v659 = vunpack.c.l.b16 %v650
    %v660 = vunpack.c.l.b16 %v651
    %v661 = vpack.c.b16 %v658, %v657
    %v662 = vpack.c.b16 %v660, %v659
    %v666 = vsel %vm28, %v647, 0
    %668 = vmatpush.bf16.msra.mxu0 0
    %669 = vmatpush.bf16.msra.mxu0 0
    %670 = vmatpush.bf16.msra.mxu0 0
    %671 = vmatpush.bf16.msra.mxu0 0
    %672 = vmatpush.bf16.msra.mxu0 0
    %673 = vmatpush.bf16.msra.mxu0 0
    %674 = vmatpush.bf16.msra.mxu0 %v662
    %675 = vmatpush.bf16.msra.mxu0 %v661
    %676 = vmatmul.bf16.gmra.mxu0 %v666
    %v677 = vpop.f32.mrf.mxu0
    %v678 = vadd.f32 %v652, %v677
    %v679 = vpop.f32.mrf.mxu0
    %v680 = vadd.f32 %v652, %v679
    %681 = vdwg.mxu0
    %v682 = vadd.f32 %v25, %v678
    %v683 = vadd.f32 %v26, %v680
    %v684 = vsel %vm28, %v682, 0.0
    %685 = vadd.xlane.f32.xlu0 %v684
    %v686 = vpop.xlane.xlu0 %685
    %v687 = vsel %vm28, %v683, 0.0
    %688 = vadd.xlane.f32.xlu0 %v687
    %v689 = vpop.xlane.xlu0 %688
    %v690 = vmul.f32 %v686, %v41
    %v691 = vmul.f32 %v689, %v41
    %v692 = vsub.f32 %v682, %v690
    %v693 = vsub.f32 %v683, %v691
    %v694 = vmul.f32 %v692, %v692
    %v695 = vmul.f32 %v693, %v693
    %v696 = vsel %vm28, %v694, 0.0
    %697 = vadd.xlane.f32.xlu0 %v696
    %v698 = vpop.xlane.xlu0 %697
    %v699 = vsel %vm28, %v695, 0.0
    %700 = vadd.xlane.f32.xlu0 %v699
    %v701 = vpop.xlane.xlu0 %700
    %v702 = vmul.f32 %v698, %v41
    %v703 = vmul.f32 %v701, %v41
    %v704 = vadd.f32 %v702, 1e-05
    %v705 = vadd.f32 %v703, 1e-05
    %v706 = vrsqrt.pop %v704
    %v707 = vmul.f32 %v706, %v704
    %v708 = vmul.f32 %v707, %v706
    %v709 = vmul.f32 0.5, %v708
    %v710 = vsub.f32 1.5, %v709
    %v711 = vmul.f32 %v706, %v710
    %vm712 = vweird.f32 %v704
    %vm713 = vweird.f32 %v706
    %vm714 = vmor %vm712, %vm713
    %v715 = vsel %vm714, %v706, %v711
    %v716 = vrsqrt.pop %v705
    %v717 = vmul.f32 %v716, %v705
    %v718 = vmul.f32 %v717, %v716
    %v719 = vmul.f32 0.5, %v718
    %v720 = vsub.f32 1.5, %v719
    %v721 = vmul.f32 %v716, %v720
    %vm722 = vweird.f32 %v705
    %vm723 = vweird.f32 %v716
    %vm724 = vmor %vm722, %vm723
    %v725 = vsel %vm724, %v716, %v721
    %v726 = vmul.f32 %v692, %v715
    %v727 = vmul.f32 %v693, %v725
    %v728 = vperm.slane %v27, 2
    %v729 = vmul.f32 %v726, %v728
    %v730 = vmul.f32 %v727, %v728
    %v731 = vperm.slane %v27, 3
    %v732 = vadd.f32 %v729, %v731
    %v733 = vadd.f32 %v730, %v731
    %v734 = vpack.c.bf16 %v733, %v732
    %v735 = vld [vmem:[%s4] sm:$0xf]
    %v736 = vld [vmem:[%s4 + $0x4] sm:$0xf]
    %v737 = vld [vmem:[%s4 + $0x8] sm:$0xf]
    %v738 = vld [vmem:[%s4 + $0xc] sm:$0xf]
    %v739 = vperm.slane %v27, 7
    %v744 = vunpack.c.l.b16 %v735
    %v745 = vunpack.c.l.b16 %v736
    %v746 = vunpack.c.l.b16 %v737
    %v747 = vunpack.c.l.b16 %v738
    %v748 = vpack.c.b16 %v745, %v744
    %v749 = vpack.c.b16 %v747, %v746
    %v753 = vsel %vm28, %v734, 0
    %755 = vmatpush.bf16.msra.mxu0 0
    %756 = vmatpush.bf16.msra.mxu0 0
    %757 = vmatpush.bf16.msra.mxu0 0
    %758 = vmatpush.bf16.msra.mxu0 0
    %759 = vmatpush.bf16.msra.mxu0 0
    %760 = vmatpush.bf16.msra.mxu0 0
    %761 = vmatpush.bf16.msra.mxu0 %v749
    %762 = vmatpush.bf16.msra.mxu0 %v748
    %763 = vmatmul.bf16.gmra.mxu0 %v753
    %v764 = vpop.f32.mrf.mxu0
    %v765 = vadd.f32 %v739, %v764
    %v766 = vpop.f32.mrf.mxu0
    %v767 = vadd.f32 %v739, %v766
    %768 = vdwg.mxu0
    %v769 = vmul.f32 %v765, 0.5
    %v770 = vmul.f32 %v767, 0.5
    %v771 = vmul.f32 %v765, 0.044715
    %v772 = vmul.f32 %v767, 0.044715
    %v773 = vmul.f32 %v771, %v765
    %v774 = vmul.f32 %v772, %v767
    %v775 = vmul.f32 %v773, %v765
    %v776 = vmul.f32 %v774, %v767
    %v777 = vadd.f32 %v765, %v775
    %v778 = vadd.f32 %v767, %v776
    %v779 = vmul.f32 %v777, 0.7978846
    %v780 = vmul.f32 %v778, 0.7978846
    %v781 = vtanh.pop %v779
    %v782 = vtanh.pop %v780
    %v783 = vadd.f32 %v781, 1.0
    %v784 = vadd.f32 %v782, 1.0
    %v785 = vmul.f32 %v769, %v783
    %v786 = vmul.f32 %v770, %v784
    %v787 = vpack.c.bf16 %v786, %v785
    %v788 = vld [vmem:[%s5] sm:$0xf]
    %v789 = vld [vmem:[%s5 + $0x4] sm:$0xf]
    %v790 = vld [vmem:[%s5 + $0x8] sm:$0xf]
    %v791 = vld [vmem:[%s5 + $0xc] sm:$0xf]
    %v792 = vld [vmem:[%s5 + $0x10] sm:$0xf]
    %v793 = vld [vmem:[%s5 + $0x14] sm:$0xf]
    %v794 = vld [vmem:[%s5 + $0x18] sm:$0xf]
    %v795 = vld [vmem:[%s5 + $0x1c] sm:$0xf]
    %v796 = vld [vmem:[%s5 + $0x20] sm:$0xf]
    %v797 = vld [vmem:[%s5 + $0x24] sm:$0xf]
    %v798 = vld [vmem:[%s5 + $0x28] sm:$0xf]
    %v799 = vld [vmem:[%s5 + $0x2c] sm:$0xf]
    %v800 = vld [vmem:[%s5 + $0x30] sm:$0xf]
    %v801 = vld [vmem:[%s5 + $0x34] sm:$0xf]
    %v802 = vld [vmem:[%s5 + $0x38] sm:$0xf]
    %v803 = vld [vmem:[%s5 + $0x3c] sm:$0xf]
    %v804 = vperm.slane %v27, 6
    %v821 = vunpack.c.l.b16 %v788
    %v822 = vunpack.c.l.b16 %v789
    %v823 = vunpack.c.l.b16 %v790
    %v824 = vunpack.c.l.b16 %v791
    %v825 = vunpack.c.l.b16 %v792
    %v826 = vunpack.c.l.b16 %v793
    %v827 = vunpack.c.l.b16 %v794
    %v828 = vunpack.c.l.b16 %v795
    %v829 = vunpack.c.l.b16 %v796
    %v830 = vunpack.c.l.b16 %v797
    %v831 = vunpack.c.l.b16 %v798
    %v832 = vunpack.c.l.b16 %v799
    %v833 = vunpack.c.l.b16 %v800
    %v834 = vunpack.c.l.b16 %v801
    %v835 = vunpack.c.l.b16 %v802
    %v836 = vunpack.c.l.b16 %v803
    %v837 = vpack.c.b16 %v822, %v821
    %v838 = vpack.c.b16 %v824, %v823
    %v839 = vpack.c.b16 %v826, %v825
    %v840 = vpack.c.b16 %v828, %v827
    %v841 = vpack.c.b16 %v830, %v829
    %v842 = vpack.c.b16 %v832, %v831
    %v843 = vpack.c.b16 %v834, %v833
    %v844 = vpack.c.b16 %v836, %v835
    %853 = vmatpush.bf16.msra.mxu0 %v844
    %854 = vmatpush.bf16.msra.mxu0 %v843
    %855 = vmatpush.bf16.msra.mxu0 %v842
    %856 = vmatpush.bf16.msra.mxu0 %v841
    %857 = vmatpush.bf16.msra.mxu0 %v840
    %858 = vmatpush.bf16.msra.mxu0 %v839
    %859 = vmatpush.bf16.msra.mxu0 %v838
    %860 = vmatpush.bf16.msra.mxu0 %v837
    %861 = vmatmul.bf16.gmra.mxu0 %v787
    %v862 = vpop.f32.mrf.mxu0
    %v863 = vadd.f32 %v804, %v862
    %v864 = vpop.f32.mrf.mxu0
    %v865 = vadd.f32 %v804, %v864
    %866 = vdwg.mxu0
    %v867 = vadd.f32 %v682, %v863
    %v868 = vadd.f32 %v683, %v865
    %869 = vst.msk [vmem:[#allocation2] sm:$0xff] %vm28, %v867
    %870 = vst.msk [vmem:[#allocation2 + $0x8] sm:$0xff] %vm28, %v868
    // Predicated region
    $region26: #{tpu_custom_call.1} parent=1 // pred_check
      _
    $region27: #{tpu_custom_call.1} parent=1 // pred_check_branch
      %872 = sbr.rel (0) target = $region29
    $region28: #{tpu_custom_call.1} parent=1 // pred_region
      %874 = vsyncadd [#allocation3], 0
      %s875 = sshll.u32 [#allocation2], 4
      %s876 = int_to_ptr.vmem [resolvable:$true] %s875
      %s877 = sshll.u32 %s6, 4
      %s878 = int_to_ptr.hbm [resolvable:$true] %s877
      %883 = dma.vmem_to_hbm [thread:$0]  %s876, 256, %s878, [#allocation3], 128, 128, 8
    $region29: #{tpu_custom_call.1} parent=1 // pred_fallthru
      _
    // Predicated region
    $region30: #{tpu_custom_call.1} parent=1 // pred_check
      _
    $region31: #{tpu_custom_call.1} parent=1 // pred_check_branch
      %885 = sbr.rel (0) target = $region33
    $region32: #{tpu_custom_call.1} parent=1 // pred_region
      %887 = dma.done [#allocation3], 256
    $region33: #{tpu_custom_call.1} parent=1 // pred_fallthru
      _
    %888 = vsyncpa [#allocation3], 1

</llo_original>
